<compile_context>
chip_gen: v6e
topology: v6e:2x2x1
jax: 0.10.0
libtpu: 0.0.40
codegen_flags: <defaults>
</compile_context>

<pallas_src>
import jax
import jax.numpy as jnp
from jax import lax
from jax.experimental import pallas as pl
from jax.experimental.pallas import tpu as pltpu

N_COORDS = 2
CONV_OUT_CH = 32
KH, KW = 3, 3
K_PAD = 128          # conv contraction depth padded to a lane-aligned MXU K
ROW_ALIGN = 16       # row-tile alignment (bf16 sublane packing)


def _round_up(x, m):
    return ((x + m - 1) // m) * m


def _feature_kernel(patches_ref, conv_w_ref, lin_w_ref, lin_bias_ref, mask_ref, out_ref):
    # conv_stem + folded BN scale + bias (bias rides the ones column) -> one MXU matmul
    y = jnp.dot(patches_ref[...], conv_w_ref[...], preferred_element_type=jnp.float32)
    y = y * jax.nn.sigmoid(y)                       # SiLU in f32 (EUP)
    # stem_linear + folded BN scale -> one MXU matmul
    x = jnp.dot(y.astype(lin_w_ref.dtype), lin_w_ref[...],
                preferred_element_type=jnp.float32)
    x = (x + lin_bias_ref[...]) * mask_ref[...]     # BN bias + masked_fill(~mask, 0)
    out_ref[...] = x.astype(out_ref.dtype)


def feature_extractor_forward(data, mask, params, *, mxu_dtype=jnp.bfloat16,
                              rpb=1024, buffer_count=2):
    """data: (bs, slen, n_landmarks, 2) f32; mask: (bs, slen) int32 in {0,1}.

    mxu_dtype: bf16 (default) feeds the MXU in its native dtype with f32 accumulation;
               pass jnp.float32 for bit-tight agreement with an f32 reference.
    rpb:       rows per grid block (rounded to a multiple of 16, clamped to the input).
    buffer_count: >2 requests pl.Buffered(n) pipelining on the patches/output streams.
    """
    bs, slen, n_lm, _ = data.shape
    w_out = (n_lm - 1) // 2 + 1                  # conv W: k=3, stride=2, pad=1
    p_w = n_lm + 2                               # padded landmark width
    k_dim = N_COORDS * KH * p_w                  # true conv contraction depth (108)
    assert k_dim < K_PAD, "K_PAD must exceed the conv contraction depth"
    wc = w_out * CONV_OUT_CH                     # flattened conv features (256)
    out_dim = params["lin_w"].shape[0]
    rows = bs * slen

    # ---- row tiling --------------------------------------------------------------
    rpb = max(ROW_ALIGN, _round_up(int(rpb), ROW_ALIGN))
    rpb = min(rpb, _round_up(rows, ROW_ALIGN))
    rows_pad = _round_up(rows, rpb)
    grid_steps = rows_pad // rpb

    # ---- trace-time glue: height patches built directly in the MXU dtype ----------
    data_c = data.astype(mxu_dtype)
    data_p = jnp.pad(data_c, ((0, 0), (1, 1), (1, 1), (0, 0)))
    slabs = []
    for c in range(N_COORDS):
        for kh in range(KH):
            slabs.append(data_p[:, kh:kh + slen, :, c])          # (bs, slen, p_w)
    patches = jnp.concatenate(slabs, axis=-1).reshape(rows, k_dim)
    ones_col = jnp.ones((rows, 1), mxu_dtype)                    # carries the conv bias
    pad_cols = jnp.zeros((rows, K_PAD - k_dim - 1), mxu_dtype)
    patches = jnp.concatenate([patches, ones_col, pad_cols], axis=-1)   # (rows, 128)

    # ---- fold parameters (trace-time constants) -----------------------------------
    eps = 1e-5
    c_scale = params["bnc_g"] / jnp.sqrt(params["bnc_v"] + eps)             # (32,)
    c_bias = params["bnc_b"] - params["bnc_m"] * c_scale                    # (32,)
    # banded conv weight: big[(c,kh,p),(w,oc)] = conv_w[oc,c,kh,p-2w] * c_scale[oc]
    w_scaled = jnp.transpose(params["conv_w"], (1, 2, 3, 0)) * c_scale      # (2,3,3,32)
    big = jnp.zeros((N_COORDS, KH, p_w, w_out, CONV_OUT_CH), jnp.float32)
    for w in range(w_out):
        big = big.at[:, :, 2 * w:2 * w + 3, w, :].set(w_scaled)
    conv_w_full = jnp.zeros((K_PAD, wc), jnp.float32)
    conv_w_full = conv_w_full.at[:k_dim].set(big.reshape(k_dim, wc))
    conv_w_full = conv_w_full.at[k_dim].set(jnp.tile(c_bias, w_out))        # bias row
    conv_w = conv_w_full.astype(mxu_dtype)                                  # (128, wc)

    s_scale = params["bns_g"] / jnp.sqrt(params["bns_v"] + eps)             # (out_dim,)
    s_bias = params["bns_b"] - params["bns_m"] * s_scale
    lin_w = (params["lin_w"].T * s_scale[None, :]).astype(mxu_dtype)        # (wc, out_dim)
    lin_bias = s_bias.reshape(1, out_dim).astype(jnp.float32)

    mask_col = mask.astype(jnp.float32).reshape(rows, 1)

    # zero-pad rows to a tile multiple (padded rows: zero patches, mask=0 -> finite 0s)
    if rows_pad != rows:
        patches = jnp.pad(patches, ((0, rows_pad - rows), (0, 0)))
        mask_col = jnp.pad(mask_col, ((0, rows_pad - rows), (0, 0)))

    def _stream_spec(shape, imap):
        if buffer_count and buffer_count > 2:
            return pl.BlockSpec(shape, imap, pipeline_mode=pl.Buffered(buffer_count))
        return pl.BlockSpec(shape, imap)

    out2d = pl.pallas_call(
        _feature_kernel,
        out_shape=jax.ShapeDtypeStruct((rows_pad, out_dim), jnp.float32),
        grid=(grid_steps,),
        in_specs=[
            _stream_spec((rpb, K_PAD), lambda i: (i, 0)),       # patches (streamed)
            pl.BlockSpec((K_PAD, wc), lambda i: (0, 0)),        # banded conv weight (+bias row)
            pl.BlockSpec((wc, out_dim), lambda i: (0, 0)),      # folded linear weight
            pl.BlockSpec((1, out_dim), lambda i: (0, 0)),       # stem BN bias
            pl.BlockSpec((rpb, 1), lambda i: (i, 0)),           # mask column
        ],
        out_specs=_stream_spec((rpb, out_dim), lambda i: (i, 0)),
        compiler_params=pltpu.CompilerParams(dimension_semantics=("parallel",)),
    )(patches, conv_w, lin_w, lin_bias, mask_col)

    if rows_pad != rows:
        out2d = out2d[:rows]
    return out2d.reshape(bs, slen, out_dim)


def _reference(data, mask, params):
    """Independent pure-JAX reference (eval-mode BN)."""
    bs, slen, n_lm, _ = data.shape
    eps = 1e-5
    xc = jnp.transpose(data, (0, 3, 1, 2))  # NCHW
    conv = lax.conv_general_dilated(xc, params["conv_w"], window_strides=(1, 2),
                                    padding=((1, 1), (1, 1)),
                                    dimension_numbers=("NCHW", "OIHW", "NCHW"))
    cs = params["bnc_g"] / jnp.sqrt(params["bnc_v"] + eps)
    cb = params["bnc_b"] - params["bnc_m"] * cs
    y = conv * cs[None, :, None, None] + cb[None, :, None, None]
    y = y * jax.nn.sigmoid(y)
    y = jnp.transpose(y, (0, 2, 3, 1)).reshape(bs, slen, -1)
    x = y @ params["lin_w"].T
    ss = params["bns_g"] / jnp.sqrt(params["bns_v"] + eps)
    sb = params["bns_b"] - params["bns_m"] * ss
    x = x * ss[None, None, :] + sb[None, None, :]
    return jnp.where(mask[..., None] == 1, x, 0.0)


if __name__ == "__main__":
    # Small shapes implied by the module: n_landmarks=16, out_dim=64, bs=2, slen=16
    n_landmarks, out_dim, bs, slen = 16, 64, 2, 16
    in_channels = 32 // 2 * n_landmarks  # 256 == (n_landmarks//2) * 32

    key = jax.random.PRNGKey(0)
    ks = jax.random.split(key, 12)
    params = {
        "conv_w": jax.random.normal(ks[0], (CONV_OUT_CH, N_COORDS, KH, KW), jnp.float32) * 0.2,
        "bnc_g": 1.0 + 0.1 * jax.random.normal(ks[1], (CONV_OUT_CH,), jnp.float32),
        "bnc_b": 0.1 * jax.random.normal(ks[2], (CONV_OUT_CH,), jnp.float32),
        "bnc_m": 0.1 * jax.random.normal(ks[3], (CONV_OUT_CH,), jnp.float32),
        "bnc_v": jax.random.uniform(ks[4], (CONV_OUT_CH,), jnp.float32, 0.5, 1.5),
        "lin_w": jax.random.normal(ks[5], (out_dim, in_channels), jnp.float32) * 0.05,
        "bns_g": 1.0 + 0.1 * jax.random.normal(ks[6], (out_dim,), jnp.float32),
        "bns_b": 0.1 * jax.random.normal(ks[7], (out_dim,), jnp.float32),
        "bns_m": 0.1 * jax.random.normal(ks[8], (out_dim,), jnp.float32),
        "bns_v": jax.random.uniform(ks[9], (out_dim,), jnp.float32, 0.5, 1.5),
    }
    data = jax.random.normal(ks[10], (bs, slen, n_landmarks, N_COORDS), jnp.float32)
    mask = jax.random.bernoulli(ks[11], 0.7, (bs, slen)).astype(jnp.int32)

    ref = jax.block_until_ready(_reference(data, mask, params))
    scale = float(jnp.max(jnp.abs(ref)))

    # 1) default path: bf16 MXU inputs, f32 accumulation (bf16-appropriate tolerance)
    out_bf16 = jax.block_until_ready(feature_extractor_forward(data, mask, params))
    assert out_bf16.shape == (bs, slen, out_dim)
    err_bf16 = float(jnp.max(jnp.abs(out_bf16 - ref)))
    assert err_bf16 < 0.05 * scale + 0.05, err_bf16

    # 2) f32 MXU path: tight check against the f32 reference
    out_f32 = jax.block_until_ready(
        feature_extractor_forward(data, mask, params, mxu_dtype=jnp.float32))
    err_f32 = float(jnp.max(jnp.abs(out_f32 - ref)))
    assert err_f32 < 1e-3, err_f32

    # 3) exercise the multi-step row-tiled grid + ragged row padding path
    bs2, slen2 = 2, 43
    data2 = jax.random.normal(ks[10], (bs2, slen2, n_landmarks, N_COORDS), jnp.float32)
    mask2 = jax.random.bernoulli(ks[11], 0.7, (bs2, slen2)).astype(jnp.int32)
    ref2 = jax.block_until_ready(_reference(data2, mask2, params))
    out2 = jax.block_until_ready(
        feature_extractor_forward(data2, mask2, params, rpb=16))
    err2 = float(jnp.max(jnp.abs(out2 - ref2)))
    scale2 = float(jnp.max(jnp.abs(ref2)))
    assert out2.shape == (bs2, slen2, out_dim)
    assert err2 < 0.05 * scale2 + 0.05, err2

    print("KERNEL_OK")
</pallas_src>

<mosaic_0001>
module attributes {stable_mosaic.version = 11 : i64} {
  func.func @_feature_kernel(%arg0: i32, %arg1: memref<32x128xbf16, #tpu.memory_space<vmem>>, %arg2: memref<128x256xbf16, #tpu.memory_space<vmem>>, %arg3: memref<256x64xbf16, #tpu.memory_space<vmem>>, %arg4: memref<1x64xf32, #tpu.memory_space<vmem>>, %arg5: memref<32x1xf32, #tpu.memory_space<vmem>>, %arg6: memref<32x64xf32, #tpu.memory_space<vmem>>) attributes {dimension_semantics = [#tpu.dimension_semantics<parallel>], iteration_bounds = array<i64: 1>, scalar_prefetch = 0 : i64, scratch_operands = 0 : i64, tpu.core_type = #tpu.core_type<tc>, window_params = [{transform_indices = @transform_0, window_bounds = array<i64: 32, 128>}, {pipeline_mode = #tpu.pipeline_mode<synchronous>, transform_indices = @transform_1, window_bounds = array<i64: 128, 256>}, {pipeline_mode = #tpu.pipeline_mode<synchronous>, transform_indices = @transform_2, window_bounds = array<i64: 256, 64>}, {pipeline_mode = #tpu.pipeline_mode<synchronous>, transform_indices = @transform_3, window_bounds = array<i64: 1, 64>}, {transform_indices = @transform_4, window_bounds = array<i64: 32, 1>}, {transform_indices = @transform_5, window_bounds = array<i64: 32, 64>}]} {
    %c0 = arith.constant 0 : index
    %c0_0 = arith.constant 0 : index
    %0 = vector.load %arg1[%c0, %c0_0] : memref<32x128xbf16, #tpu.memory_space<vmem>>, vector<32x128xbf16>
    %c0_1 = arith.constant 0 : index
    %c0_2 = arith.constant 0 : index
    %1 = vector.load %arg2[%c0_1, %c0_2] : memref<128x256xbf16, #tpu.memory_space<vmem>>, vector<128x256xbf16>
    %cst = arith.constant dense<0.000000e+00> : vector<32x256xf32>
    %2 = tpu.matmul %0, %1, %cst {dimension_numbers = #tpu.dot_dimension_numbers<[1], [0], [0], [1], [0, 0, 1, 1], [], []>} : vector<32x128xbf16>, vector<128x256xbf16>, vector<32x256xf32> -> vector<32x256xf32>
    %3 = arith.negf %2 : vector<32x256xf32>
    %4 = math.exp %3 : vector<32x256xf32>
    %cst_3 = arith.constant 1.000000e+00 : f32
    %5 = vector.broadcast %cst_3 : f32 to vector<32x256xf32>
    %6 = arith.addf %5, %4 : vector<32x256xf32>
    %7 = arith.divf %5, %6 : vector<32x256xf32>
    %8 = arith.mulf %2, %7 : vector<32x256xf32>
    %9 = arith.truncf %8 : vector<32x256xf32> to vector<32x256xbf16>
    %c0_4 = arith.constant 0 : index
    %c0_5 = arith.constant 0 : index
    %10 = vector.load %arg3[%c0_4, %c0_5] : memref<256x64xbf16, #tpu.memory_space<vmem>>, vector<256x64xbf16>
    %cst_6 = arith.constant dense<0.000000e+00> : vector<32x64xf32>
    %11 = tpu.matmul %9, %10, %cst_6 {dimension_numbers = #tpu.dot_dimension_numbers<[1], [0], [0], [1], [0, 0, 1, 1], [], []>} : vector<32x256xbf16>, vector<256x64xbf16>, vector<32x64xf32> -> vector<32x64xf32>
    %c0_7 = arith.constant 0 : index
    %c0_8 = arith.constant 0 : index
    %12 = vector.load %arg4[%c0_7, %c0_8] : memref<1x64xf32, #tpu.memory_space<vmem>>, vector<1x64xf32>
    %13 = vector.broadcast %12 : vector<1x64xf32> to vector<32x64xf32>
    %14 = arith.addf %11, %13 : vector<32x64xf32>
    %c0_9 = arith.constant 0 : index
    %c0_10 = arith.constant 0 : index
    %15 = vector.load %arg5[%c0_9, %c0_10] : memref<32x1xf32, #tpu.memory_space<vmem>>, vector<32x1xf32>
    %16 = vector.broadcast %15 : vector<32x1xf32> to vector<32x64xf32>
    %17 = arith.mulf %14, %16 : vector<32x64xf32>
    %c0_11 = arith.constant 0 : index
    %c0_12 = arith.constant 0 : index
    %18 = vector.load %arg6[%c0_11, %c0_12] : memref<32x64xf32, #tpu.memory_space<vmem>>, vector<32x64xf32>
    tpu.vector_store %arg6[%c0_11, %c0_12], %17 {strides = array<i32>} : memref<32x64xf32, #tpu.memory_space<vmem>>, vector<32x64xf32>,
    return
  }
  func.func @transform_0(%arg0: i32) -> (i32, i32) {
    %c0_i32 = arith.constant 0 : i32
    %c0_i32_0 = arith.constant 0 : i32
    return %arg0, %c0_i32 : i32, i32
  }
  func.func @transform_1(%arg0: i32) -> (i32, i32) {
    %c0_i32 = arith.constant 0 : i32
    %c0_i32_0 = arith.constant 0 : i32
    %c0_i32_1 = arith.constant 0 : i32
    return %c0_i32, %c0_i32_0 : i32, i32
  }
  func.func @transform_2(%arg0: i32) -> (i32, i32) {
    %c0_i32 = arith.constant 0 : i32
    %c0_i32_0 = arith.constant 0 : i32
    %c0_i32_1 = arith.constant 0 : i32
    return %c0_i32, %c0_i32_0 : i32, i32
  }
  func.func @transform_3(%arg0: i32) -> (i32, i32) {
    %c0_i32 = arith.constant 0 : i32
    %c0_i32_0 = arith.constant 0 : i32
    %c0_i32_1 = arith.constant 0 : i32
    return %c0_i32, %c0_i32_0 : i32, i32
  }
  func.func @transform_4(%arg0: i32) -> (i32, i32) {
    %c0_i32 = arith.constant 0 : i32
    %c0_i32_0 = arith.constant 0 : i32
    return %arg0, %c0_i32 : i32, i32
  }
  func.func @transform_5(%arg0: i32) -> (i32, i32) {
    %c0_i32 = arith.constant 0 : i32
    %c0_i32_0 = arith.constant 0 : i32
    return %arg0, %c0_i32 : i32, i32
  }
}

</mosaic_0001>

<llo_original>
// kernel: tpu_custom_call.1
$region0: #{tpu_custom_call.1}
  #allocation0 [shape = 'u32[]', space=smem, size = 0x4, offset = 0x4, fixed_abs, tag = 'smem constant byte address 0x4 - core index']
  #allocation1 [shape = 'u32[144,128]{1,0:T(1,128)}', space=vmem, size = 0x12000, scoped, tag = 'internal scratch']
  %s0 = inlined_call_operand.vmem [shape: bf16[32,128], index: 0, kind: input, shape index: {}]
  %s1 = inlined_call_operand.vmem [shape: bf16[128,256], index: 1, kind: input, shape index: {}]
  %s2 = inlined_call_operand.vmem [shape: bf16[256,64], index: 2, kind: input, shape index: {}]
  %s3 = inlined_call_operand.vmem [shape: f32[1,64], index: 3, kind: input, shape index: {}]
  %s4 = inlined_call_operand.vmem [shape: f32[32,1], index: 4, kind: input, shape index: {}]
  %s5 = inlined_call_operand.hbm [shape: f32[32,64], index: 5, kind: output, shape index: {}]
  %s6 = sld [smem:[#allocation0]]
  $region30: #{tpu_custom_call.1} parent=0
    _
  %s8 = ssub.s32 1, %s6
  %s9 = scalar_select 0, %s8, %s6
  $region1: #{tpu_custom_call.1} parent=0
    #allocation2 [shape = 'u8[16384]{0}', space=vmem, size = 0x4000, scoped, tag = 'output window, operand 0, single buffered']
    #allocation3 [shape = 's32[1]{0}', space=sflag, size = 0x4, scoped, tag = 'scoped memory for tpu_custom_call.1']
    %10 = vsyncpa [#allocation3], 0
    // Predicated region
    $region2: #{tpu_custom_call.1} parent=1 // pred_check
      _
    $region3: #{tpu_custom_call.1} parent=1 // pred_check_branch
      %12 = sbr.rel (0) target = $region5
    $region4: #{tpu_custom_call.1} parent=1 // pred_region
      _
    $region5: #{tpu_custom_call.1} parent=1 // pred_fallthru
      _
    // Predicated region
    $region6: #{tpu_custom_call.1} parent=1 // pred_check
      _
    $region7: #{tpu_custom_call.1} parent=1 // pred_check_branch
      %14 = sbr.rel (0) target = $region9
    $region8: #{tpu_custom_call.1} parent=1 // pred_region
      _
    $region9: #{tpu_custom_call.1} parent=1 // pred_fallthru
      _
    // Predicated region
    $region10: #{tpu_custom_call.1} parent=1 // pred_check
      _
    $region11: #{tpu_custom_call.1} parent=1 // pred_check_branch
      %16 = sbr.rel (0) target = $region13
    $region12: #{tpu_custom_call.1} parent=1 // pred_region
      _
    $region13: #{tpu_custom_call.1} parent=1 // pred_fallthru
      _
    // Predicated region
    $region14: #{tpu_custom_call.1} parent=1 // pred_check
      _
    $region15: #{tpu_custom_call.1} parent=1 // pred_check_branch
      %18 = sbr.rel (0) target = $region17
    $region16: #{tpu_custom_call.1} parent=1 // pred_region
      _
    $region17: #{tpu_custom_call.1} parent=1 // pred_fallthru
      _
    // Predicated region
    $region18: #{tpu_custom_call.1} parent=1 // pred_check
      _
    $region19: #{tpu_custom_call.1} parent=1 // pred_check_branch
      %20 = sbr.rel (0) target = $region21
    $region20: #{tpu_custom_call.1} parent=1 // pred_region
      _
    $region21: #{tpu_custom_call.1} parent=1 // pred_fallthru
      _
    %v22 = vld [vmem:[%s0] sm:$0xf]
    %v23 = vld [vmem:[%s0 + $0x4] sm:$0xf]
    %v24 = vld [vmem:[%s0 + $0x8] sm:$0xf]
    %v25 = vld [vmem:[%s0 + $0xc] sm:$0xf]
    %v26 = vld [vmem:[%s1] sm:$0xff]
    %v27 = vld [vmem:[%s1 + $0x8] sm:$0xff]
    %v28 = vld [vmem:[%s1 + $0x10] sm:$0xff]
    %v29 = vld [vmem:[%s1 + $0x18] sm:$0xff]
    %v30 = vld [vmem:[%s1 + $0x20] sm:$0xff]
    %v31 = vld [vmem:[%s1 + $0x28] sm:$0xff]
    %v32 = vld [vmem:[%s1 + $0x30] sm:$0xff]
    %v33 = vld [vmem:[%s1 + $0x38] sm:$0xff]
    %v34 = vld [vmem:[%s1 + $0x40] sm:$0xff]
    %v35 = vld [vmem:[%s1 + $0x48] sm:$0xff]
    %v36 = vld [vmem:[%s1 + $0x50] sm:$0xff]
    %v37 = vld [vmem:[%s1 + $0x58] sm:$0xff]
    %v38 = vld [vmem:[%s1 + $0x60] sm:$0xff]
    %v39 = vld [vmem:[%s1 + $0x68] sm:$0xff]
    %v40 = vld [vmem:[%s1 + $0x70] sm:$0xff]
    %v41 = vld [vmem:[%s1 + $0x78] sm:$0xff]
    %v46 = vunpack.c.l.b16 %v22
    %v47 = vunpack.c.l.b16 %v23
    %v48 = vunpack.c.l.b16 %v24
    %v49 = vunpack.c.l.b16 %v25
    %v50 = vpack.c.b16 %v47, %v46
    %v51 = vpack.c.b16 %v49, %v48
    %v70 = vunpack.c.l.b16 %v26
    %v71 = vunpack.c.h.b16 %v26
    %v72 = vunpack.c.l.b16 %v27
    %v73 = vunpack.c.h.b16 %v27
    %v74 = vunpack.c.l.b16 %v28
    %v75 = vunpack.c.h.b16 %v28
    %v76 = vunpack.c.l.b16 %v29
    %v77 = vunpack.c.h.b16 %v29
    %v78 = vunpack.c.l.b16 %v30
    %v79 = vunpack.c.h.b16 %v30
    %v80 = vunpack.c.l.b16 %v31
    %v81 = vunpack.c.h.b16 %v31
    %v82 = vunpack.c.l.b16 %v32
    %v83 = vunpack.c.h.b16 %v32
    %v84 = vunpack.c.l.b16 %v33
    %v85 = vunpack.c.h.b16 %v33
    %v86 = vunpack.c.l.b16 %v34
    %v87 = vunpack.c.h.b16 %v34
    %v88 = vunpack.c.l.b16 %v35
    %v89 = vunpack.c.h.b16 %v35
    %v90 = vunpack.c.l.b16 %v36
    %v91 = vunpack.c.h.b16 %v36
    %v92 = vunpack.c.l.b16 %v37
    %v93 = vunpack.c.h.b16 %v37
    %v94 = vunpack.c.l.b16 %v38
    %v95 = vunpack.c.h.b16 %v38
    %v96 = vunpack.c.l.b16 %v39
    %v97 = vunpack.c.h.b16 %v39
    %v98 = vunpack.c.l.b16 %v40
    %v99 = vunpack.c.h.b16 %v40
    %v100 = vunpack.c.l.b16 %v41
    %v101 = vunpack.c.h.b16 %v41
    %v102 = vpack.c.b16 %v72, %v70
    %v103 = vpack.c.b16 %v73, %v71
    %v104 = vpack.c.b16 %v76, %v74
    %v105 = vpack.c.b16 %v77, %v75
    %v106 = vpack.c.b16 %v80, %v78
    %v107 = vpack.c.b16 %v81, %v79
    %v108 = vpack.c.b16 %v84, %v82
    %v109 = vpack.c.b16 %v85, %v83
    %v110 = vpack.c.b16 %v88, %v86
    %v111 = vpack.c.b16 %v89, %v87
    %v112 = vpack.c.b16 %v92, %v90
    %v113 = vpack.c.b16 %v93, %v91
    %v114 = vpack.c.b16 %v96, %v94
    %v115 = vpack.c.b16 %v97, %v95
    %v116 = vpack.c.b16 %v100, %v98
    %v117 = vpack.c.b16 %v101, %v99
    %134 = vmatprep.subr.bf16.mxu0 %v117
    %135 = vmatpush1.bf16.msra.mxu0 %v116
    %136 = vmatprep.subr.bf16.mxu0 %v115
    %137 = vmatpush1.bf16.msra.mxu0 %v114
    %138 = vmatprep.subr.bf16.mxu0 %v113
    %139 = vmatpush1.bf16.msra.mxu0 %v112
    %140 = vmatprep.subr.bf16.mxu0 %v111
    %141 = vmatpush1.bf16.msra.mxu0 %v110
    %142 = vmatprep.subr.bf16.mxu0 %v109
    %143 = vmatpush1.bf16.msra.mxu0 %v108
    %144 = vmatprep.subr.bf16.mxu0 %v107
    %145 = vmatpush1.bf16.msra.mxu0 %v106
    %146 = vmatprep.subr.bf16.mxu0 %v105
    %147 = vmatpush1.bf16.msra.mxu0 %v104
    %148 = vmatprep.subr.bf16.mxu0 %v103
    %149 = vmatpush1.bf16.msra.mxu0 %v102
    %150 = vmatprep.subr.bf16.mxu0 0
    %151 = vmatpush2.bf16.msra.mxu0 0
    %152 = vmatprep.subr.bf16.mxu0 0
    %153 = vmatpush2.bf16.msra.mxu0 0
    %154 = vmatprep.subr.bf16.mxu0 0
    %155 = vmatpush2.bf16.msra.mxu0 0
    %156 = vmatprep.subr.bf16.mxu0 0
    %157 = vmatpush2.bf16.msra.mxu0 0
    %158 = vmatprep.subr.bf16.mxu0 0
    %159 = vmatpush2.bf16.msra.mxu0 0
    %160 = vmatprep.subr.bf16.mxu0 0
    %161 = vmatpush2.bf16.msra.mxu0 0
    %162 = vmatprep.subr.bf16.mxu0 0
    %163 = vmatpush2.bf16.msra.mxu0 0
    %164 = vmatprep.subr.bf16.mxu0 0
    %165 = vmatpush2.bf16.msra.mxu0 0
    %166 = vmatprep.mubr.bf16.mxu0 0
    %167 = vmatmul.mubr.bf16.gmra.mxu0 %v50
    %v168 = vpop.f32.mrf.mxu0
    %v169 = vadd.f32 0.0, %v168
    %v170 = vpop.f32.mrf.mxu0
    %v171 = vadd.f32 0.0, %v170
    %v172 = vpop.f32.mrf.mxu0
    %v173 = vadd.f32 0.0, %v172
    %v174 = vpop.f32.mrf.mxu0
    %v175 = vadd.f32 0.0, %v174
    %176 = vmatprep.mubr.bf16.mxu0 0
    %177 = vmatmul.mubr.bf16.gmra.mxu0 %v51
    %v178 = vpop.f32.mrf.mxu0
    %v179 = vadd.f32 0.0, %v178
    %v180 = vpop.f32.mrf.mxu0
    %v181 = vadd.f32 0.0, %v180
    %v182 = vpop.f32.mrf.mxu0
    %v183 = vadd.f32 0.0, %v182
    %v184 = vpop.f32.mrf.mxu0
    %v185 = vadd.f32 0.0, %v184
    %186 = vdwg.mxu0
    %v187 = vxor.u32 %v169, 2147483648
    %v188 = vxor.u32 %v171, 2147483648
    %v189 = vxor.u32 %v173, 2147483648
    %v190 = vxor.u32 %v175, 2147483648
    %v191 = vxor.u32 %v179, 2147483648
    %v192 = vxor.u32 %v181, 2147483648
    %v193 = vxor.u32 %v183, 2147483648
    %v194 = vxor.u32 %v185, 2147483648
    %v195 = vmul.f32 %v187, 1.442695
    %v196 = vpow.pop %v195
    %v197 = vmul.f32 %v188, 1.442695
    %v198 = vpow.pop %v197
    %v199 = vmul.f32 %v189, 1.442695
    %v200 = vpow.pop %v199
    %v201 = vmul.f32 %v190, 1.442695
    %v202 = vpow.pop %v201
    %v203 = vmul.f32 %v191, 1.442695
    %v204 = vpow.pop %v203
    %v205 = vmul.f32 %v192, 1.442695
    %v206 = vpow.pop %v205
    %v207 = vmul.f32 %v193, 1.442695
    %v208 = vpow.pop %v207
    %v209 = vmul.f32 %v194, 1.442695
    %v210 = vpow.pop %v209
    %v211 = vadd.f32 %v196, 1.0
    %v212 = vadd.f32 %v198, 1.0
    %v213 = vadd.f32 %v200, 1.0
    %v214 = vadd.f32 %v202, 1.0
    %v215 = vadd.f32 %v204, 1.0
    %v216 = vadd.f32 %v206, 1.0
    %v217 = vadd.f32 %v208, 1.0
    %v218 = vadd.f32 %v210, 1.0
    %v219 = vrcp.pop %v211
    %v220 = vmul.f32 1.0, %v219
    %v221 = vrcp.pop %v212
    %v222 = vmul.f32 1.0, %v221
    %v223 = vrcp.pop %v213
    %v224 = vmul.f32 1.0, %v223
    %v225 = vrcp.pop %v214
    %v226 = vmul.f32 1.0, %v225
    %v227 = vrcp.pop %v215
    %v228 = vmul.f32 1.0, %v227
    %v229 = vrcp.pop %v216
    %v230 = vmul.f32 1.0, %v229
    %v231 = vrcp.pop %v217
    %v232 = vmul.f32 1.0, %v231
    %v233 = vrcp.pop %v218
    %v234 = vmul.f32 1.0, %v233
    %v235 = vmul.f32 %v169, %v220
    %v236 = vmul.f32 %v171, %v222
    %v237 = vmul.f32 %v173, %v224
    %v238 = vmul.f32 %v175, %v226
    %v239 = vmul.f32 %v179, %v228
    %v240 = vmul.f32 %v181, %v230
    %v241 = vmul.f32 %v183, %v232
    %v242 = vmul.f32 %v185, %v234
    %v243 = vpack.c.bf16 %v237, %v235
    %v244 = vpack.c.bf16 %v238, %v236
    %v245 = vpack.c.bf16 %v241, %v239
    %v246 = vpack.c.bf16 %v242, %v240
    %v247 = vld [vmem:[%s2] sm:$0xf]
    %v248 = vld [vmem:[%s2 + $0x4] sm:$0xf]
    %v249 = vld [vmem:[%s2 + $0x8] sm:$0xf]
    %v250 = vld [vmem:[%s2 + $0xc] sm:$0xf]
    %v251 = vld [vmem:[%s2 + $0x10] sm:$0xf]
    %v252 = vld [vmem:[%s2 + $0x14] sm:$0xf]
    %v253 = vld [vmem:[%s2 + $0x18] sm:$0xf]
    %v254 = vld [vmem:[%s2 + $0x1c] sm:$0xf]
    %v255 = vld [vmem:[%s2 + $0x20] sm:$0xf]
    %v256 = vld [vmem:[%s2 + $0x24] sm:$0xf]
    %v257 = vld [vmem:[%s2 + $0x28] sm:$0xf]
    %v258 = vld [vmem:[%s2 + $0x2c] sm:$0xf]
    %v259 = vld [vmem:[%s2 + $0x30] sm:$0xf]
    %v260 = vld [vmem:[%s2 + $0x34] sm:$0xf]
    %v261 = vld [vmem:[%s2 + $0x38] sm:$0xf]
    %v262 = vld [vmem:[%s2 + $0x3c] sm:$0xf]
    %v263 = vld [vmem:[%s2 + $0x40] sm:$0xf]
    %v264 = vld [vmem:[%s2 + $0x44] sm:$0xf]
    %v265 = vld [vmem:[%s2 + $0x48] sm:$0xf]
    %v266 = vld [vmem:[%s2 + $0x4c] sm:$0xf]
    %v267 = vld [vmem:[%s2 + $0x50] sm:$0xf]
    %v268 = vld [vmem:[%s2 + $0x54] sm:$0xf]
    %v269 = vld [vmem:[%s2 + $0x58] sm:$0xf]
    %v270 = vld [vmem:[%s2 + $0x5c] sm:$0xf]
    %v271 = vld [vmem:[%s2 + $0x60] sm:$0xf]
    %v272 = vld [vmem:[%s2 + $0x64] sm:$0xf]
    %v273 = vld [vmem:[%s2 + $0x68] sm:$0xf]
    %v274 = vld [vmem:[%s2 + $0x6c] sm:$0xf]
    %v275 = vld [vmem:[%s2 + $0x70] sm:$0xf]
    %v276 = vld [vmem:[%s2 + $0x74] sm:$0xf]
    %v277 = vld [vmem:[%s2 + $0x78] sm:$0xf]
    %v278 = vld [vmem:[%s2 + $0x7c] sm:$0xf]
    %v279 = vld [vmem:[%s3] sm:$0x1]
    %v281 = vlaneseq
    %v282 = vshrl.u32 %v281, 7
    %v283 = vsub.s32 0, %v282
    %v284 = vrot.slane %v279, %v283
    %v318 = vunpack.c.l.b16 %v247
    %v319 = vunpack.c.l.b16 %v248
    %v320 = vunpack.c.l.b16 %v249
    %v321 = vunpack.c.l.b16 %v250
    %v322 = vunpack.c.l.b16 %v251
    %v323 = vunpack.c.l.b16 %v252
    %v324 = vunpack.c.l.b16 %v253
    %v325 = vunpack.c.l.b16 %v254
    %v326 = vunpack.c.l.b16 %v255
    %v327 = vunpack.c.l.b16 %v256
    %v328 = vunpack.c.l.b16 %v257
    %v329 = vunpack.c.l.b16 %v258
    %v330 = vunpack.c.l.b16 %v259
    %v331 = vunpack.c.l.b16 %v260
    %v332 = vunpack.c.l.b16 %v261
    %v333 = vunpack.c.l.b16 %v262
    %v334 = vunpack.c.l.b16 %v263
    %v335 = vunpack.c.l.b16 %v264
    %v336 = vunpack.c.l.b16 %v265
    %v337 = vunpack.c.l.b16 %v266
    %v338 = vunpack.c.l.b16 %v267
    %v339 = vunpack.c.l.b16 %v268
    %v340 = vunpack.c.l.b16 %v269
    %v341 = vunpack.c.l.b16 %v270
    %v342 = vunpack.c.l.b16 %v271
    %v343 = vunpack.c.l.b16 %v272
    %v344 = vunpack.c.l.b16 %v273
    %v345 = vunpack.c.l.b16 %v274
    %v346 = vunpack.c.l.b16 %v275
    %v347 = vunpack.c.l.b16 %v276
    %v348 = vunpack.c.l.b16 %v277
    %v349 = vunpack.c.l.b16 %v278
    %v350 = vpack.c.b16 %v319, %v318
    %v351 = vpack.c.b16 %v321, %v320
    %v352 = vpack.c.b16 %v323, %v322
    %v353 = vpack.c.b16 %v325, %v324
    %v354 = vpack.c.b16 %v327, %v326
    %v355 = vpack.c.b16 %v329, %v328
    %v356 = vpack.c.b16 %v331, %v330
    %v357 = vpack.c.b16 %v333, %v332
    %v358 = vpack.c.b16 %v335, %v334
    %v359 = vpack.c.b16 %v337, %v336
    %v360 = vpack.c.b16 %v339, %v338
    %v361 = vpack.c.b16 %v341, %v340
    %v362 = vpack.c.b16 %v343, %v342
    %v363 = vpack.c.b16 %v345, %v344
    %v364 = vpack.c.b16 %v347, %v346
    %v365 = vpack.c.b16 %v349, %v348
    %382 = vmatprep.subr.bf16.mxu0 0
    %383 = vmatpush1.bf16.msra.mxu0 %v357
    %384 = vmatprep.subr.bf16.mxu0 0
    %385 = vmatpush1.bf16.msra.mxu0 %v356
    %386 = vmatprep.subr.bf16.mxu0 0
    %387 = vmatpush1.bf16.msra.mxu0 %v355
    %388 = vmatprep.subr.bf16.mxu0 0
    %389 = vmatpush1.bf16.msra.mxu0 %v354
    %390 = vmatprep.subr.bf16.mxu0 0
    %391 = vmatpush1.bf16.msra.mxu0 %v353
    %392 = vmatprep.subr.bf16.mxu0 0
    %393 = vmatpush1.bf16.msra.mxu0 %v352
    %394 = vmatprep.subr.bf16.mxu0 0
    %395 = vmatpush1.bf16.msra.mxu0 %v351
    %396 = vmatprep.subr.bf16.mxu0 0
    %397 = vmatpush1.bf16.msra.mxu0 %v350
    %398 = vmatprep.subr.bf16.mxu0 0
    %399 = vmatpush2.bf16.msra.mxu0 %v365
    %400 = vmatprep.subr.bf16.mxu0 0
    %401 = vmatpush2.bf16.msra.mxu0 %v364
    %402 = vmatprep.subr.bf16.mxu0 0
    %403 = vmatpush2.bf16.msra.mxu0 %v363
    %404 = vmatprep.subr.bf16.mxu0 0
    %405 = vmatpush2.bf16.msra.mxu0 %v362
    %406 = vmatprep.subr.bf16.mxu0 0
    %407 = vmatpush2.bf16.msra.mxu0 %v361
    %408 = vmatprep.subr.bf16.mxu0 0
    %409 = vmatpush2.bf16.msra.mxu0 %v360
    %410 = vmatprep.subr.bf16.mxu0 0
    %411 = vmatpush2.bf16.msra.mxu0 %v359
    %412 = vmatprep.subr.bf16.mxu0 0
    %413 = vmatpush2.bf16.msra.mxu0 %v358
    %414 = vmatprep.mubr.bf16.mxu0 %v244
    %415 = vmatmul.mubr.bf16.gmra.mxu0 %v243
    %v416 = vpop.f32.mrf.mxu0
    %v417 = vadd.f32 %v284, %v416
    %v418 = vpop.f32.mrf.mxu0
    %v419 = vpop.f32.mrf.mxu0
    %v420 = vadd.f32 %v284, %v419
    %v421 = vpop.f32.mrf.mxu0
    %422 = vmatprep.mubr.bf16.mxu0 %v246
    %423 = vmatmul.mubr.bf16.gmra.mxu0 %v245
    %v424 = vpop.f32.mrf.mxu0
    %v425 = vadd.f32 %v284, %v424
    %v426 = vpop.f32.mrf.mxu0
    %v427 = vpop.f32.mrf.mxu0
    %v428 = vadd.f32 %v284, %v427
    %v429 = vpop.f32.mrf.mxu0
    %430 = vdwg.mxu0
    %v431 = vld [vmem:[%s4] sm:$0xff]
    %v432 = vld [vmem:[%s4 + $0x8] sm:$0xff]
    %v433 = vld [vmem:[%s4 + $0x10] sm:$0xff]
    %v434 = vld [vmem:[%s4 + $0x18] sm:$0xff]
    %436 = vset.pattern.permute.xlu0 0
    %437 = vperm.xlu0 %436, %v431
    %v438 = vpop.permute.xlu0 %437
    %441 = vset.pattern.permute.xlu0 0
    %442 = vperm.xlu0 %441, %v432
    %v443 = vpop.permute.xlu0 %442
    %446 = vset.pattern.permute.xlu0 0
    %447 = vperm.xlu0 %446, %v433
    %v448 = vpop.permute.xlu0 %447
    %451 = vset.pattern.permute.xlu0 0
    %452 = vperm.xlu0 %451, %v434
    %v453 = vpop.permute.xlu0 %452
    %v455 = vmul.f32 %v417, %v438
    %v456 = vmul.f32 %v420, %v443
    %v457 = vmul.f32 %v425, %v448
    %v458 = vmul.f32 %v428, %v453
    %vm459 = vcmask 523264
    %460 = vst.msk [vmem:[#allocation2] sm:$0xff] %vm459, %v455
    %461 = vst.msk [vmem:[#allocation2 + $0x8] sm:$0xff] %vm459, %v456
    %462 = vst.msk [vmem:[#allocation2 + $0x10] sm:$0xff] %vm459, %v457
    %463 = vst.msk [vmem:[#allocation2 + $0x18] sm:$0xff] %vm459, %v458
    // Predicated region
    $region22: #{tpu_custom_call.1} parent=1 // pred_check
      _
    $region23: #{tpu_custom_call.1} parent=1 // pred_check_branch
      %465 = sbr.rel (0) target = $region25
    $region24: #{tpu_custom_call.1} parent=1 // pred_region
      %s467 = ssub.s32 512, 512
      %468 = vsyncadd [#allocation3], %s467
      %s469 = sshll.u32 [#allocation2], 4
      %s470 = int_to_ptr.vmem [resolvable:$true] %s469
      %475 = dma.vmem_to_hbm [thread:$0]  %s470, 512, %s5, [#allocation3], 128, 128, 8
    $region25: #{tpu_custom_call.1} parent=1 // pred_fallthru
      _
    // Predicated region
    $region26: #{tpu_custom_call.1} parent=1 // pred_check
      _
    $region27: #{tpu_custom_call.1} parent=1 // pred_check_branch
      %477 = sbr.rel (0) target = $region29
    $region28: #{tpu_custom_call.1} parent=1 // pred_region
      %478 = dma.done [#allocation3], 512
    $region29: #{tpu_custom_call.1} parent=1 // pred_fallthru
      _
    %479 = vsyncpa [#allocation3], 1

</llo_original>
